<compile_context>
chip_gen: v5e
topology: v5e:2x2
jax: 0.10.0
libtpu: 0.0.40
codegen_flags: <defaults>
</compile_context>

<pallas_src>
import math

import jax
import jax.numpy as jnp
from jax.experimental import pallas as pl
from jax.experimental.pallas import tpu as pltpu


_LANE = 128
_TARGET_BLOCK_BYTES = 4 * 1024 * 1024     # ~4 MiB per x / out block (physical)
_MAX_LANES = 32 * _LANE                   # cap slab width at 4096 lanes
_VMEM_LIMIT_BYTES = 48 * 1024 * 1024      # > v5e's 16 MiB default, < v7x 64 MiB


def _round_up(x, m):
    return -(-x // m) * m


def _drop_path_kernel(mask_ref, x_ref, o_ref):
    # mask_ref: (tile_rows, 1) per-row keep mask, pre-scaled by 1/keep_prob,
    #           already in x.dtype.
    # x_ref/o_ref: (tile_rows, tile_lanes) slabs.  One vld + one broadcast VPU
    # multiply + one vst per vreg -- purely HBM-bandwidth bound; no MXU.
    o_ref[...] = x_ref[...] * mask_ref[...]


def _compiler_params(grid_len):
    return pltpu.CompilerParams(
        dimension_semantics=("parallel",) * grid_len,
        vmem_limit_bytes=_VMEM_LIMIT_BYTES,
    )


def drop_path_pallas(x, drop_prob: float, training: bool, key,
                     donate_x: bool = False):
    """Stochastic depth, per-sample.  Matches torch drop_path semantics."""
    if drop_prob == 0.0 or not training:
        return x
    if not jnp.issubdtype(x.dtype, jnp.floating):
        raise NotImplementedError(
            "drop_path_pallas supports floating dtypes only "
            "(integer inputs would silently truncate 1/keep_prob).")

    keep_prob = 1.0 - drop_prob
    B = x.shape[0]
    F = int(math.prod(x.shape[1:])) if x.ndim > 1 else 1

    # Per-sample bernoulli(keep_prob) mask: floor(keep_prob + U[0,1)), same
    # construction as torch.  Fold 1/keep_prob in here (B scalars -> free) so
    # the kernel is a single multiply.  For bf16 this scale happens in x.dtype.
    rand = jax.random.uniform(key, (B, 1), dtype=jnp.float32)
    scaled_mask = (jnp.floor(keep_prob + rand) / keep_prob).astype(x.dtype)

    itemsize = jnp.dtype(x.dtype).itemsize
    sub = max(8, 32 // itemsize)            # native sublane packing: 8/16/32

    if F % _LANE == 0:
        # ---- lane-aligned: free reshape to a lane-dense (R, C) slab --------
        m = F // _LANE
        max_k = min(m, _MAX_LANES // _LANE)
        k = max(d for d in range(1, max_k + 1) if m % d == 0)
        C = _LANE * k
        rows_per_sample = F // C
        R = B * rows_per_sample

        x2 = x.reshape(R, C)
        row_mask = scaled_mask if rows_per_sample == 1 else jnp.repeat(
            scaled_mask, rows_per_sample, axis=0)            # (R, 1), tiny

        # Per-row physical VMEM cost: C lanes for x + 128 padded lanes for the
        # (tile_r, 1) mask block (keeps narrow-C cases from blowing VMEM).
        row_bytes = (C + _LANE) * itemsize
        tile_r = max(sub, (_TARGET_BLOCK_BYTES // row_bytes) // sub * sub)
        if R > sub:
            # Keep >= 2 grid steps so both v7x TensorCores get a share.
            tile_r = min(tile_r, _round_up(-(-R // 2), sub))
        if tile_r >= R:
            tile_r = R

        grid = (pl.cdiv(R, tile_r),)
        in_specs = [
            pl.BlockSpec((tile_r, 1), lambda i: (i, 0)),     # per-row mask
            pl.BlockSpec((tile_r, C), lambda i: (i, 0)),     # x slab
        ]
        out_specs = pl.BlockSpec((tile_r, C), lambda i: (i, 0))
        out_shape = jax.ShapeDtypeStruct((R, C), x.dtype)
        mask_arg, x_arg = row_mask, x2
    else:
        # ---- F not 128-aligned: tile the unpadded (B, F) view directly -----
        # No jnp.pad / out[:, :F] slice (each would be a full extra HBM pass);
        # the ragged last lane block is handled by the BlockSpec pipeline.
        x2 = x.reshape(B, F)
        tile_b = B if B <= sub else min(B // sub * sub, 8 * sub)
        phys_b = _round_up(tile_b, sub)     # sublane-padded footprint in VMEM
        lane_budget = max(
            _LANE, (_TARGET_BLOCK_BYTES // (phys_b * itemsize)) // _LANE * _LANE)
        tile_f = F if lane_budget >= F else lane_budget

        # Keep >= 2 grid steps when splittable (v7x megacore).
        if pl.cdiv(B, tile_b) * pl.cdiv(F, tile_f) == 1:
            if F > _LANE:
                tile_f = _round_up(-(-F // 2), _LANE)
            elif B > sub:
                tile_b = _round_up(-(-B // 2), sub)

        grid = (pl.cdiv(B, tile_b), pl.cdiv(F, tile_f))
        in_specs = [
            pl.BlockSpec((tile_b, 1), lambda i, j: (i, 0)),        # per-sample mask
            pl.BlockSpec((tile_b, tile_f), lambda i, j: (i, j)),   # x tile
        ]
        out_specs = pl.BlockSpec((tile_b, tile_f), lambda i, j: (i, j))
        out_shape = jax.ShapeDtypeStruct((B, F), x.dtype)
        mask_arg, x_arg = scaled_mask, x2

    call_kwargs = {}
    if donate_x:
        call_kwargs["input_output_aliases"] = {1: 0}   # output reuses x's buffer

    out = pl.pallas_call(
        _drop_path_kernel,
        out_shape=out_shape,
        grid_spec=pltpu.PrefetchScalarGridSpec(
            num_scalar_prefetch=0,
            grid=grid,
            in_specs=in_specs,
            out_specs=out_specs,
        ),
        compiler_params=_compiler_params(len(grid)),
        **call_kwargs,
    )(mask_arg, x_arg)

    return out.reshape(x.shape)


class DropPath:
    """Drop paths (Stochastic Depth) per sample — Pallas TPU version."""

    def __init__(self, drop_prob=None):
        self.drop_prob = drop_prob if drop_prob is not None else 0.0
        self.training = True

    def __call__(self, x, key, donate_x=False):
        return drop_path_pallas(x, self.drop_prob, self.training, key,
                                donate_x=donate_x)


def _drop_path_ref(x, drop_prob, key):
    """Pure-JAX reference with the same mask construction / key."""
    keep_prob = 1.0 - drop_prob
    rand = jax.random.uniform(key, (x.shape[0], 1), dtype=jnp.float32)
    scaled = (jnp.floor(keep_prob + rand) / keep_prob).astype(x.dtype)
    scaled = scaled.reshape((x.shape[0],) + (1,) * (x.ndim - 1))
    return x * scaled


if __name__ == "__main__":
    root = jax.random.PRNGKey(0)

    cases = [
        # (shape, dtype, drop_prob) — small ViT-like token tensors
        ((2, 8, 32), jnp.float32, 0.25),    # F=256: aligned slab, single block
        ((16, 24, 64), jnp.float32, 0.5),   # F=1536: aligned slab, multi-step grid
        ((4, 7, 36), jnp.float32, 0.25),    # F=252: unaligned, ragged lane block
        ((8, 8, 32), jnp.bfloat16, 0.1),    # bf16 path
    ]

    for idx, (shape, dtype, p) in enumerate(cases):
        k_x, k_drop = jax.random.split(jax.random.fold_in(root, idx))
        x = jax.random.normal(k_x, shape, dtype=dtype)

        module = DropPath(drop_prob=p)
        module.training = True
        y = jax.block_until_ready(module(x, k_drop))
        y_ref = _drop_path_ref(x, p, k_drop)

        assert y.shape == x.shape and y.dtype == x.dtype
        tol = 1e-6 if dtype == jnp.float32 else 1e-2
        assert jnp.allclose(y.astype(jnp.float32), y_ref.astype(jnp.float32),
                            atol=tol, rtol=tol), f"mismatch in case {idx}"

        # Eval mode (or drop_prob == 0) must be the identity.
        module.training = False
        y_eval = jax.block_until_ready(module(x, k_drop))
        assert jnp.array_equal(y_eval, x)

    print("KERNEL_OK")
</pallas_src>

<mosaic_0001>
module attributes {stable_mosaic.version = 11 : i64} {
  func.func @_drop_path_kernel(%arg0: i32, %arg1: memref<2x1xf32, #tpu.memory_space<vmem>>, %arg2: memref<2x256xf32, #tpu.memory_space<vmem>>, %arg3: memref<2x256xf32, #tpu.memory_space<vmem>>) attributes {dimension_semantics = [#tpu.dimension_semantics<parallel>], iteration_bounds = array<i64: 1>, scalar_prefetch = 0 : i64, scratch_operands = 0 : i64, tpu.core_type = #tpu.core_type<tc>, window_params = [{transform_indices = @transform_0, window_bounds = array<i64: 2, 1>}, {transform_indices = @transform_1, window_bounds = array<i64: 2, 256>}, {transform_indices = @transform_2, window_bounds = array<i64: 2, 256>}]} {
    %c0 = arith.constant 0 : index
    %c0_0 = arith.constant 0 : index
    %0 = vector.load %arg2[%c0, %c0_0] : memref<2x256xf32, #tpu.memory_space<vmem>>, vector<2x256xf32>
    %c0_1 = arith.constant 0 : index
    %c0_2 = arith.constant 0 : index
    %1 = vector.load %arg1[%c0_1, %c0_2] : memref<2x1xf32, #tpu.memory_space<vmem>>, vector<2x1xf32>
    %2 = vector.broadcast %1 : vector<2x1xf32> to vector<2x256xf32>
    %3 = arith.mulf %0, %2 : vector<2x256xf32>
    %c0_3 = arith.constant 0 : index
    %c0_4 = arith.constant 0 : index
    %4 = vector.load %arg3[%c0_3, %c0_4] : memref<2x256xf32, #tpu.memory_space<vmem>>, vector<2x256xf32>
    tpu.vector_store %arg3[%c0_3, %c0_4], %3 {strides = array<i32>} : memref<2x256xf32, #tpu.memory_space<vmem>>, vector<2x256xf32>,
    return
  }
  func.func @transform_0(%arg0: i32) -> (i32, i32) {
    %c0_i32 = arith.constant 0 : i32
    %c0_i32_0 = arith.constant 0 : i32
    return %arg0, %c0_i32 : i32, i32
  }
  func.func @transform_1(%arg0: i32) -> (i32, i32) {
    %c0_i32 = arith.constant 0 : i32
    %c0_i32_0 = arith.constant 0 : i32
    return %arg0, %c0_i32 : i32, i32
  }
  func.func @transform_2(%arg0: i32) -> (i32, i32) {
    %c0_i32 = arith.constant 0 : i32
    %c0_i32_0 = arith.constant 0 : i32
    return %arg0, %c0_i32 : i32, i32
  }
}

</mosaic_0001>

<llo_original>
// kernel: tpu_custom_call.1
$region0: #{tpu_custom_call.1}
  #allocation0 [shape = 'u32[]', space=smem, size = 0x4, offset = 0x4, fixed_abs, tag = 'smem constant byte address 0x4 - core index']
  #allocation1 [shape = 'u32[72,128]{1,0:T(1,128)}', space=vmem, size = 0x9000, scoped, tag = 'internal scratch']
  %s0 = inlined_call_operand.vmem [shape: f32[2,1], index: 0, kind: input, shape index: {}]
  %s1 = inlined_call_operand.hbm [shape: f32[2,256], index: 1, kind: input, shape index: {}]
  %s2 = inlined_call_operand.hbm [shape: f32[2,256], index: 2, kind: output, shape index: {}]
  %s3 = sld [smem:[#allocation0]]
  $region22: #{tpu_custom_call.1} parent=0
    _
  %s5 = ssub.s32 1, %s3
  %s6 = scalar_select 0, %s5, %s3
  $region1: #{tpu_custom_call.1} parent=0
    #allocation2 [shape = 'u8[2048]{0}', space=vmem, size = 0x800, scoped, tag = 'input window, operand 1, single buffered']
    #allocation3 [shape = 's32[1]{0}', space=sflag, size = 0x4, scoped, tag = 'scoped memory for tpu_custom_call.1']
    #allocation4 [shape = 's32[1]{0}', space=sflag, size = 0x4, scoped, tag = 'scoped memory for tpu_custom_call.1']
    #allocation5 [shape = 'u8[2048]{0}', space=vmem, size = 0x800, scoped, tag = 'output window, operand 0, single buffered']
    %7 = vsyncpa [#allocation3], 0
    %8 = vsyncpa [#allocation4], 0
    // Predicated region
    $region2: #{tpu_custom_call.1} parent=1 // pred_check
      _
    $region3: #{tpu_custom_call.1} parent=1 // pred_check_branch
      %10 = sbr.rel (0) target = $region5
    $region4: #{tpu_custom_call.1} parent=1 // pred_region
      _
    $region5: #{tpu_custom_call.1} parent=1 // pred_fallthru
      _
    // Predicated region
    $region6: #{tpu_custom_call.1} parent=1 // pred_check
      _
    $region7: #{tpu_custom_call.1} parent=1 // pred_check_branch
      %12 = sbr.rel (0) target = $region9
    $region8: #{tpu_custom_call.1} parent=1 // pred_region
      %14 = vsyncadd [#allocation3], 0
      %s16 = sshll.u32 %s1, 4
      %s17 = int_to_ptr.hbm [resolvable:$true] %s16
      %s18 = sshll.u32 [#allocation2], 4
      %s19 = int_to_ptr.vmem [resolvable:$true] %s18
      %21 = dma.hbm_to_vmem [thread:$0]  %s17, 64, %s19, [#allocation3]
    $region9: #{tpu_custom_call.1} parent=1 // pred_fallthru
      _
    // Predicated region
    $region10: #{tpu_custom_call.1} parent=1 // pred_check
      _
    $region11: #{tpu_custom_call.1} parent=1 // pred_check_branch
      %23 = sbr.rel (0) target = $region13
    $region12: #{tpu_custom_call.1} parent=1 // pred_region
      %25 = dma.done [#allocation3], 64
    $region13: #{tpu_custom_call.1} parent=1 // pred_fallthru
      _
    %v26 = vld [vmem:[#allocation2] sm:$0xf]
    %v27 = vld [vmem:[%s0] sm:$0x3]
    %29 = vset.pattern.permute.xlu0 0
    %30 = vperm.xlu0 %29, %v27
    %v31 = vpop.permute.xlu0 %30
    %v33 = vunpack.c.l.s4 269488144
    %v34 = vunpack.c.0.s8 %v33
    %v35 = vperm.slane %v31, %v34
    %v37 = vmul.f32 %v26, %v35
    %38 = vst [vmem:[#allocation5] sm:$0xf] %v37
    // Predicated region
    $region14: #{tpu_custom_call.1} parent=1 // pred_check
      _
    $region15: #{tpu_custom_call.1} parent=1 // pred_check_branch
      %40 = sbr.rel (0) target = $region17
    $region16: #{tpu_custom_call.1} parent=1 // pred_region
      %42 = vsyncadd [#allocation4], 0
      %s44 = sshll.u32 [#allocation5], 4
      %s45 = int_to_ptr.vmem [resolvable:$true] %s44
      %s46 = sshll.u32 %s2, 4
      %s47 = int_to_ptr.hbm [resolvable:$true] %s46
      %49 = dma.vmem_to_hbm [thread:$0]  %s45, 64, %s47, [#allocation4]
    $region17: #{tpu_custom_call.1} parent=1 // pred_fallthru
      _
    // Predicated region
    $region18: #{tpu_custom_call.1} parent=1 // pred_check
      _
    $region19: #{tpu_custom_call.1} parent=1 // pred_check_branch
      %51 = sbr.rel (0) target = $region21
    $region20: #{tpu_custom_call.1} parent=1 // pred_region
      %53 = dma.done [#allocation4], 64
    $region21: #{tpu_custom_call.1} parent=1 // pred_fallthru
      _
    %54 = vsyncpa [#allocation3], 1
    %55 = vsyncpa [#allocation4], 1

</llo_original>
